<compile_context>
chip_gen: v7x
topology: tpu7x:2x2x1
jax: 0.10.0
libtpu: 0.0.40
codegen_flags: <defaults>
</compile_context>

<pallas_src>
import jax
import jax.numpy as jnp
from jax.experimental import pallas as pl
from jax.experimental.pallas import tpu as pltpu


def _last_block_kernel(x_ref, w1_ref, b1_ref, w2_ref, b2_ref, w3_ref, b3_ref,
                       out_ref):
    # x_ref:  (BN, C, L)          f32
    # w1_ref: (H, 3C)  bf16       b1_ref: (H, 1) f32
    # w2_ref: (H, 3H)  bf16       b2_ref: (H, 1) f32
    # w3_ref: (O, H)   bf16       b3_ref: (O, 1) f32
    # out_ref:(BN, O, L+2)
    f32 = jnp.float32
    bf16 = jnp.bfloat16
    bn, _, length = x_ref.shape

    # Per-column boundary predicates (the padding=1 zeros).  No `% seg_len`
    # needed: each block row is one whole batch element.
    pos = jax.lax.broadcasted_iota(jnp.int32, (1, 1, length), 2)
    not_first = pos != 0
    not_last = pos != length - 1

    def stack_taps(v):
        # v: (bn, ch, L) f32 -> (bn, 3*ch, L) bf16, rows = [x_{l-1}; x_l; x_{l+1}].
        # Shift + mask the (small) input rather than the (larger) conv output.
        left = jnp.where(not_first, jnp.roll(v, 1, axis=-1), 0.0)
        right = jnp.where(not_last, jnp.roll(v, -1, axis=-1), 0.0)
        return jnp.concatenate([left, v, right], axis=1).astype(bf16)

    def bmm(w_ref, v_bf16):
        # One fused-tap MXU matmul per batch element, f32 accumulation.
        wb = jnp.broadcast_to(w_ref[...][None], (bn,) + w_ref.shape)
        return jnp.einsum('bok,bkl->bol', wb, v_bf16,
                          preferred_element_type=f32)

    x = x_ref[...]
    h1 = jnp.maximum(bmm(w1_ref, stack_taps(x)) + b1_ref[...][None], 0.0)
    h2 = jnp.maximum(bmm(w2_ref, stack_taps(h1)) + b2_ref[...][None], 0.0)

    # conv3: kernel_size=1 with padding=1 -> interior columns = W3 @ h2 + b3;
    # the two edge columns only ever see the zero padding, i.e. equal b3.
    y3 = bmm(w3_ref, h2.astype(bf16)) + b3_ref[...][None]
    edge = jnp.broadcast_to(b3_ref[...][None], (bn, y3.shape[1], 1))
    out_ref[...] = jnp.concatenate([edge, y3, edge],
                                   axis=-1).astype(out_ref.dtype)


def _vmem_capacity_bytes():
    try:
        return int(pltpu.get_tpu_info().vmem_capacity_bytes)
    except Exception:
        return 64 * 1024 * 1024  # conservative (v7x per-core size)


def _pick_block_n(n, c, h, o, length, budget_bytes, *, min_steps=2):
    """Largest divisor of n whose per-step VMEM footprint fits the budget,
    while keeping >= min_steps grid steps (v7x 2-TC sharding) when possible.
    The batch dim is the leading block dim, so any divisor is layout-legal
    (last two block dims always equal the full array dims)."""
    per_elem = 4 * (
        2 * c * length            # x block, double-buffered
        + 2 * o * (length + 2)    # out block, double-buffered
        + (3 * c + h) * length    # tap stack 1 + h1
        + (3 * h + h) * length    # tap stack 2 + h2
        + o * length              # y3
    )
    cap = max(1, budget_bytes // max(per_elem, 1))
    if n >= min_steps:
        cap = min(cap, n // min_steps)
    cap = min(cap, n)
    for d in range(cap, 0, -1):
        if n % d == 0:
            return d
    return 1


def last_block_pallas(x, w1, b1, w2, b2, w3, b3, *, block_n=None):
    """x: (N, C, L) float32. Returns (N, O, L+2), matching PyTorch LastBlock."""
    n, c, length = x.shape
    h = w1.shape[0]
    o = w3.shape[0]

    vmem_cap = _vmem_capacity_bytes()
    if block_n is None:
        block_n = _pick_block_n(n, c, h, o, length, vmem_cap // 2)
    assert n % block_n == 0, (n, block_n)

    # Tiny host-side weight prep only (no HBM passes over x / output):
    # fuse the 3 taps along the contraction axis, ordered [k=0 | k=1 | k=2]
    # == [x_{l-1} | x_l | x_{l+1}], and cast matmul operands to bf16.
    w1f = jnp.transpose(w1, (0, 2, 1)).reshape(h, 3 * c).astype(jnp.bfloat16)
    w2f = jnp.transpose(w2, (0, 2, 1)).reshape(h, 3 * h).astype(jnp.bfloat16)
    w3f = w3[:, :, 0].astype(jnp.bfloat16)
    b1c = b1.reshape(h, 1).astype(jnp.float32)
    b2c = b2.reshape(h, 1).astype(jnp.float32)
    b3c = b3.reshape(o, 1).astype(jnp.float32)

    grid_spec = pltpu.PrefetchScalarGridSpec(
        num_scalar_prefetch=0,
        grid=(n // block_n,),
        in_specs=[
            pl.BlockSpec((block_n, c, length), lambda i: (i, 0, 0)),
            pl.BlockSpec((h, 3 * c), lambda i: (0, 0)),
            pl.BlockSpec((h, 1), lambda i: (0, 0)),
            pl.BlockSpec((h, 3 * h), lambda i: (0, 0)),
            pl.BlockSpec((h, 1), lambda i: (0, 0)),
            pl.BlockSpec((o, h), lambda i: (0, 0)),
            pl.BlockSpec((o, 1), lambda i: (0, 0)),
        ],
        out_specs=pl.BlockSpec((block_n, o, length + 2), lambda i: (i, 0, 0)),
    )

    return pl.pallas_call(
        _last_block_kernel,
        out_shape=jax.ShapeDtypeStruct((n, o, length + 2), x.dtype),
        grid_spec=grid_spec,
        compiler_params=pltpu.CompilerParams(
            dimension_semantics=("parallel",),
            vmem_limit_bytes=int(vmem_cap * 3 // 4)),
    )(x, w1f, b1c, w2f, b2c, w3f, b3c)


def last_block_ref(x, w1, b1, w2, b2, w3, b3):
    """Pure-JAX reference using lax.conv_general_dilated (NCL layout)."""
    dn = jax.lax.conv_dimension_numbers(x.shape, w1.shape, ("NCH", "OIH", "NCH"))
    y1 = jax.lax.conv_general_dilated(x, w1, (1,), [(1, 1)],
                                      dimension_numbers=dn) + b1[None, :, None]
    h1 = jnp.maximum(y1, 0.0)
    y2 = jax.lax.conv_general_dilated(h1, w2, (1,), [(1, 1)],
                                      dimension_numbers=dn) + b2[None, :, None]
    h2 = jnp.maximum(y2, 0.0)
    y3 = jax.lax.conv_general_dilated(h2, w3, (1,), [(1, 1)],
                                      dimension_numbers=dn) + b3[None, :, None]
    return y3


if __name__ == "__main__":
    # Small shapes: batch=2, in_channels=4, hidden=8, out=4, length=16
    N, C_in, H, O, L = 2, 4, 8, 4, 16

    key = jax.random.PRNGKey(0)
    k = jax.random.split(key, 7)
    x = jax.random.normal(k[0], (N, C_in, L), jnp.float32)
    w1 = jax.random.normal(k[1], (H, C_in, 3), jnp.float32) * 0.1
    b1 = jax.random.normal(k[2], (H,), jnp.float32) * 0.1
    w2 = jax.random.normal(k[3], (H, H, 3), jnp.float32) * 0.1
    b2 = jax.random.normal(k[4], (H,), jnp.float32) * 0.1
    w3 = jax.random.normal(k[5], (O, H, 1), jnp.float32) * 0.1
    b3 = jax.random.normal(k[6], (O,), jnp.float32) * 0.1

    out = last_block_pallas(x, w1, b1, w2, b2, w3, b3)
    out = jax.block_until_ready(out)

    ref = last_block_ref(x, w1, b1, w2, b2, w3, b3)
    assert out.shape == (N, O, L + 2), out.shape
    # bf16 matmul operands (f32 accumulation) -> loosened tolerance.
    assert jnp.allclose(out, ref, rtol=2e-2, atol=2e-2), "mismatch vs reference"

    print("KERNEL_OK")
</pallas_src>

<mosaic_0001>
module attributes {stable_mosaic.version = 11 : i64} {
  func.func @_last_block_kernel(%arg0: i32, %arg1: memref<1x4x16xf32, #tpu.memory_space<vmem>>, %arg2: memref<8x12xbf16, #tpu.memory_space<vmem>>, %arg3: memref<8x1xf32, #tpu.memory_space<vmem>>, %arg4: memref<8x24xbf16, #tpu.memory_space<vmem>>, %arg5: memref<8x1xf32, #tpu.memory_space<vmem>>, %arg6: memref<4x8xbf16, #tpu.memory_space<vmem>>, %arg7: memref<4x1xf32, #tpu.memory_space<vmem>>, %arg8: memref<1x4x18xf32, #tpu.memory_space<vmem>>) attributes {dimension_semantics = [#tpu.dimension_semantics<parallel>], iteration_bounds = array<i64: 2>, scalar_prefetch = 0 : i64, scratch_operands = 0 : i64, tpu.core_type = #tpu.core_type<tc>, window_params = [{transform_indices = @transform_0, window_bounds = array<i64: 1, 4, 16>}, {pipeline_mode = #tpu.pipeline_mode<synchronous>, transform_indices = @transform_1, window_bounds = array<i64: 8, 12>}, {pipeline_mode = #tpu.pipeline_mode<synchronous>, transform_indices = @transform_2, window_bounds = array<i64: 8, 1>}, {pipeline_mode = #tpu.pipeline_mode<synchronous>, transform_indices = @transform_3, window_bounds = array<i64: 8, 24>}, {pipeline_mode = #tpu.pipeline_mode<synchronous>, transform_indices = @transform_4, window_bounds = array<i64: 8, 1>}, {pipeline_mode = #tpu.pipeline_mode<synchronous>, transform_indices = @transform_5, window_bounds = array<i64: 4, 8>}, {pipeline_mode = #tpu.pipeline_mode<synchronous>, transform_indices = @transform_6, window_bounds = array<i64: 4, 1>}, {transform_indices = @transform_7, window_bounds = array<i64: 1, 4, 18>}]} {
    %0 = tpu.iota {dimensions = array<i32: 2>} : vector<1x1x16xi32>
    %c0_i32 = arith.constant 0 : i32
    %1 = vector.broadcast %c0_i32 : i32 to vector<1x1x16xi32>
    %2 = arith.cmpi ne, %0, %1 : vector<1x1x16xi32>
    %c15_i32 = arith.constant 15 : i32
    %3 = vector.broadcast %c15_i32 : i32 to vector<1x1x16xi32>
    %4 = arith.cmpi ne, %0, %3 : vector<1x1x16xi32>
    %c0 = arith.constant 0 : index
    %c0_0 = arith.constant 0 : index
    %c0_1 = arith.constant 0 : index
    %5 = vector.load %arg1[%c0, %c0_0, %c0_1] : memref<1x4x16xf32, #tpu.memory_space<vmem>>, vector<1x4x16xf32>
    %6 = vector.extract_strided_slice %5 {offsets = [0, 0, 15], sizes = [1, 4, 1], strides = [1, 1, 1]} : vector<1x4x16xf32> to vector<1x4x1xf32>
    %7 = vector.extract_strided_slice %5 {offsets = [0, 0, 0], sizes = [1, 4, 15], strides = [1, 1, 1]} : vector<1x4x16xf32> to vector<1x4x15xf32>
    %8 = tpu.concatenate %6, %7 in 2 : vector<1x4x1xf32>, vector<1x4x15xf32> -> vector<1x4x16xf32>
    %cst = arith.constant 0.000000e+00 : f32
    %9 = vector.shape_cast %2 : vector<1x1x16xi1> to vector<1x1x16xi1>
    %10 = vector.broadcast %9 : vector<1x1x16xi1> to vector<1x4x16xi1>
    %11 = vector.broadcast %cst : f32 to vector<1x4x16xf32>
    %12 = arith.select %10, %8, %11 : vector<1x4x16xi1>, vector<1x4x16xf32>
    %13 = vector.extract_strided_slice %5 {offsets = [0, 0, 1], sizes = [1, 4, 15], strides = [1, 1, 1]} : vector<1x4x16xf32> to vector<1x4x15xf32>
    %14 = vector.extract_strided_slice %5 {offsets = [0, 0, 0], sizes = [1, 4, 1], strides = [1, 1, 1]} : vector<1x4x16xf32> to vector<1x4x1xf32>
    %15 = tpu.concatenate %13, %14 in 2 : vector<1x4x15xf32>, vector<1x4x1xf32> -> vector<1x4x16xf32>
    %cst_2 = arith.constant 0.000000e+00 : f32
    %16 = vector.shape_cast %4 : vector<1x1x16xi1> to vector<1x1x16xi1>
    %17 = vector.broadcast %16 : vector<1x1x16xi1> to vector<1x4x16xi1>
    %18 = vector.broadcast %cst_2 : f32 to vector<1x4x16xf32>
    %19 = arith.select %17, %15, %18 : vector<1x4x16xi1>, vector<1x4x16xf32>
    %20 = tpu.concatenate %12, %5, %19 in 1 : vector<1x4x16xf32>, vector<1x4x16xf32>, vector<1x4x16xf32> -> vector<1x12x16xf32>
    %21 = arith.truncf %20 : vector<1x12x16xf32> to vector<1x12x16xbf16>
    %c0_3 = arith.constant 0 : index
    %c0_4 = arith.constant 0 : index
    %22 = vector.load %arg2[%c0_3, %c0_4] : memref<8x12xbf16, #tpu.memory_space<vmem>>, vector<8x12xbf16>
    %23 = vector.shape_cast %22 : vector<8x12xbf16> to vector<1x8x12xbf16>
    "tpu.trace_start"() <{level = 10 : i32, message = "bok,bkl->bol"}> : () -> ()
    %cst_5 = arith.constant dense<0.000000e+00> : vector<1x8x16xf32>
    %24 = tpu.matmul %23, %21, %cst_5 {dimension_numbers = #tpu.dot_dimension_numbers<[2], [1], [1], [2], [0, 0, 0, 1, 1, 2], [0], [0]>} : vector<1x8x12xbf16>, vector<1x12x16xbf16>, vector<1x8x16xf32> -> vector<1x8x16xf32>
    "tpu.trace_stop"() : () -> ()
    %c0_6 = arith.constant 0 : index
    %c0_7 = arith.constant 0 : index
    %25 = vector.load %arg3[%c0_6, %c0_7] : memref<8x1xf32, #tpu.memory_space<vmem>>, vector<8x1xf32>
    %26 = vector.shape_cast %25 : vector<8x1xf32> to vector<1x8x1xf32>
    %27 = vector.broadcast %26 : vector<1x8x1xf32> to vector<1x8x16xf32>
    %28 = arith.addf %24, %27 : vector<1x8x16xf32>
    %cst_8 = arith.constant 0.000000e+00 : f32
    %29 = vector.broadcast %cst_8 : f32 to vector<1x8x16xf32>
    %30 = arith.maximumf %28, %29 : vector<1x8x16xf32>
    %31 = vector.extract_strided_slice %30 {offsets = [0, 0, 15], sizes = [1, 8, 1], strides = [1, 1, 1]} : vector<1x8x16xf32> to vector<1x8x1xf32>
    %32 = vector.extract_strided_slice %30 {offsets = [0, 0, 0], sizes = [1, 8, 15], strides = [1, 1, 1]} : vector<1x8x16xf32> to vector<1x8x15xf32>
    %33 = tpu.concatenate %31, %32 in 2 : vector<1x8x1xf32>, vector<1x8x15xf32> -> vector<1x8x16xf32>
    %cst_9 = arith.constant 0.000000e+00 : f32
    %34 = vector.shape_cast %2 : vector<1x1x16xi1> to vector<1x1x16xi1>
    %35 = vector.broadcast %34 : vector<1x1x16xi1> to vector<1x8x16xi1>
    %36 = vector.broadcast %cst_9 : f32 to vector<1x8x16xf32>
    %37 = arith.select %35, %33, %36 : vector<1x8x16xi1>, vector<1x8x16xf32>
    %38 = vector.extract_strided_slice %30 {offsets = [0, 0, 1], sizes = [1, 8, 15], strides = [1, 1, 1]} : vector<1x8x16xf32> to vector<1x8x15xf32>
    %39 = vector.extract_strided_slice %30 {offsets = [0, 0, 0], sizes = [1, 8, 1], strides = [1, 1, 1]} : vector<1x8x16xf32> to vector<1x8x1xf32>
    %40 = tpu.concatenate %38, %39 in 2 : vector<1x8x15xf32>, vector<1x8x1xf32> -> vector<1x8x16xf32>
    %cst_10 = arith.constant 0.000000e+00 : f32
    %41 = vector.shape_cast %4 : vector<1x1x16xi1> to vector<1x1x16xi1>
    %42 = vector.broadcast %41 : vector<1x1x16xi1> to vector<1x8x16xi1>
    %43 = vector.broadcast %cst_10 : f32 to vector<1x8x16xf32>
    %44 = arith.select %42, %40, %43 : vector<1x8x16xi1>, vector<1x8x16xf32>
    %45 = tpu.concatenate %37, %30, %44 in 1 : vector<1x8x16xf32>, vector<1x8x16xf32>, vector<1x8x16xf32> -> vector<1x24x16xf32>
    %46 = arith.truncf %45 : vector<1x24x16xf32> to vector<1x24x16xbf16>
    %c0_11 = arith.constant 0 : index
    %c0_12 = arith.constant 0 : index
    %47 = vector.load %arg4[%c0_11, %c0_12] : memref<8x24xbf16, #tpu.memory_space<vmem>>, vector<8x24xbf16>
    %48 = vector.shape_cast %47 : vector<8x24xbf16> to vector<1x8x24xbf16>
    "tpu.trace_start"() <{level = 10 : i32, message = "bok,bkl->bol"}> : () -> ()
    %cst_13 = arith.constant dense<0.000000e+00> : vector<1x8x16xf32>
    %49 = tpu.matmul %48, %46, %cst_13 {dimension_numbers = #tpu.dot_dimension_numbers<[2], [1], [1], [2], [0, 0, 0, 1, 1, 2], [0], [0]>} : vector<1x8x24xbf16>, vector<1x24x16xbf16>, vector<1x8x16xf32> -> vector<1x8x16xf32>
    "tpu.trace_stop"() : () -> ()
    %c0_14 = arith.constant 0 : index
    %c0_15 = arith.constant 0 : index
    %50 = vector.load %arg5[%c0_14, %c0_15] : memref<8x1xf32, #tpu.memory_space<vmem>>, vector<8x1xf32>
    %51 = vector.shape_cast %50 : vector<8x1xf32> to vector<1x8x1xf32>
    %52 = vector.broadcast %51 : vector<1x8x1xf32> to vector<1x8x16xf32>
    %53 = arith.addf %49, %52 : vector<1x8x16xf32>
    %cst_16 = arith.constant 0.000000e+00 : f32
    %54 = vector.broadcast %cst_16 : f32 to vector<1x8x16xf32>
    %55 = arith.maximumf %53, %54 : vector<1x8x16xf32>
    %56 = arith.truncf %55 : vector<1x8x16xf32> to vector<1x8x16xbf16>
    %c0_17 = arith.constant 0 : index
    %c0_18 = arith.constant 0 : index
    %57 = vector.load %arg6[%c0_17, %c0_18] : memref<4x8xbf16, #tpu.memory_space<vmem>>, vector<4x8xbf16>
    %58 = vector.shape_cast %57 : vector<4x8xbf16> to vector<1x4x8xbf16>
    "tpu.trace_start"() <{level = 10 : i32, message = "bok,bkl->bol"}> : () -> ()
    %cst_19 = arith.constant dense<0.000000e+00> : vector<1x4x16xf32>
    %59 = tpu.matmul %58, %56, %cst_19 {dimension_numbers = #tpu.dot_dimension_numbers<[2], [1], [1], [2], [0, 0, 0, 1, 1, 2], [0], [0]>} : vector<1x4x8xbf16>, vector<1x8x16xbf16>, vector<1x4x16xf32> -> vector<1x4x16xf32>
    "tpu.trace_stop"() : () -> ()
    %c0_20 = arith.constant 0 : index
    %c0_21 = arith.constant 0 : index
    %60 = vector.load %arg7[%c0_20, %c0_21] : memref<4x1xf32, #tpu.memory_space<vmem>>, vector<4x1xf32>
    %61 = vector.shape_cast %60 : vector<4x1xf32> to vector<1x4x1xf32>
    %62 = vector.broadcast %61 : vector<1x4x1xf32> to vector<1x4x16xf32>
    %63 = arith.addf %59, %62 : vector<1x4x16xf32>
    %c0_22 = arith.constant 0 : index
    %c0_23 = arith.constant 0 : index
    %64 = vector.load %arg7[%c0_22, %c0_23] : memref<4x1xf32, #tpu.memory_space<vmem>>, vector<4x1xf32>
    %65 = vector.shape_cast %64 : vector<4x1xf32> to vector<1x4x1xf32>
    %66 = tpu.concatenate %65, %63, %65 in 2 : vector<1x4x1xf32>, vector<1x4x16xf32>, vector<1x4x1xf32> -> vector<1x4x18xf32>
    %c0_24 = arith.constant 0 : index
    %c0_25 = arith.constant 0 : index
    %c0_26 = arith.constant 0 : index
    %67 = vector.load %arg8[%c0_24, %c0_25, %c0_26] : memref<1x4x18xf32, #tpu.memory_space<vmem>>, vector<1x4x18xf32>
    tpu.vector_store %arg8[%c0_24, %c0_25, %c0_26], %66 {strides = array<i32>} : memref<1x4x18xf32, #tpu.memory_space<vmem>>, vector<1x4x18xf32>,
    return
  }
  func.func @transform_0(%arg0: i32) -> (i32, i32, i32) {
    %c0_i32 = arith.constant 0 : i32
    %c0_i32_0 = arith.constant 0 : i32
    %c0_i32_1 = arith.constant 0 : i32
    return %arg0, %c0_i32, %c0_i32_0 : i32, i32, i32
  }
  func.func @transform_1(%arg0: i32) -> (i32, i32) {
    %c0_i32 = arith.constant 0 : i32
    %c0_i32_0 = arith.constant 0 : i32
    %c0_i32_1 = arith.constant 0 : i32
    return %c0_i32, %c0_i32_0 : i32, i32
  }
  func.func @transform_2(%arg0: i32) -> (i32, i32) {
    %c0_i32 = arith.constant 0 : i32
    %c0_i32_0 = arith.constant 0 : i32
    %c0_i32_1 = arith.constant 0 : i32
    return %c0_i32, %c0_i32_0 : i32, i32
  }
  func.func @transform_3(%arg0: i32) -> (i32, i32) {
    %c0_i32 = arith.constant 0 : i32
    %c0_i32_0 = arith.constant 0 : i32
    %c0_i32_1 = arith.constant 0 : i32
    return %c0_i32, %c0_i32_0 : i32, i32
  }
  func.func @transform_4(%arg0: i32) -> (i32, i32) {
    %c0_i32 = arith.constant 0 : i32
    %c0_i32_0 = arith.constant 0 : i32
    %c0_i32_1 = arith.constant 0 : i32
    return %c0_i32, %c0_i32_0 : i32, i32
  }
  func.func @transform_5(%arg0: i32) -> (i32, i32) {
    %c0_i32 = arith.constant 0 : i32
    %c0_i32_0 = arith.constant 0 : i32
    %c0_i32_1 = arith.constant 0 : i32
    return %c0_i32, %c0_i32_0 : i32, i32
  }
  func.func @transform_6(%arg0: i32) -> (i32, i32) {
    %c0_i32 = arith.constant 0 : i32
    %c0_i32_0 = arith.constant 0 : i32
    %c0_i32_1 = arith.constant 0 : i32
    return %c0_i32, %c0_i32_0 : i32, i32
  }
  func.func @transform_7(%arg0: i32) -> (i32, i32, i32) {
    %c0_i32 = arith.constant 0 : i32
    %c0_i32_0 = arith.constant 0 : i32
    %c0_i32_1 = arith.constant 0 : i32
    return %arg0, %c0_i32, %c0_i32_0 : i32, i32, i32
  }
}

</mosaic_0001>

<llo_original>
// kernel: tpu_custom_call.1
$region0: #{tpu_custom_call.1}
  #allocation0 [shape = 'u32[]', space=smem, size = 0x4, offset = 0x4, fixed_abs, tag = 'smem constant byte address 0x4 - core index']
  #allocation1 [shape = 'u32[144,128]{1,0:T(1,128)}', space=vmem, size = 0x12000, scoped, tag = 'internal scratch']
  %s0 = inlined_call_operand.vmem [shape: f32[2,4,16], index: 0, kind: input, shape index: {}]
  %s1 = inlined_call_operand.vmem [shape: bf16[8,12], index: 1, kind: input, shape index: {}]
  %s2 = inlined_call_operand.vmem [shape: f32[8,1], index: 2, kind: input, shape index: {}]
  %s3 = inlined_call_operand.vmem [shape: bf16[8,24], index: 3, kind: input, shape index: {}]
  %s4 = inlined_call_operand.vmem [shape: f32[8,1], index: 4, kind: input, shape index: {}]
  %s5 = inlined_call_operand.vmem [shape: bf16[4,8], index: 5, kind: input, shape index: {}]
  %s6 = inlined_call_operand.vmem [shape: f32[4,1], index: 6, kind: input, shape index: {}]
  %s7 = inlined_call_operand.hbm [shape: f32[2,4,18], index: 7, kind: output, shape index: {}]
  %s8 = sld [smem:[#allocation0]]
  $region61: #{tpu_custom_call.1} parent=0
    _
  %s10 = ssub.s32 1, %s8
  %s11 = scalar_select 0, %s10, %s8
  $region1: #{tpu_custom_call.1} parent=0
    #allocation2 [shape = 'u8[4096]{0}', space=vmem, size = 0x1000, scoped, tag = 'output window, operand 0']
    #allocation3 [shape = 's32[2]{0}', space=sflag, size = 0x8, scoped, tag = 'scoped memory for tpu_custom_call.1']
    %12 = vsyncpa [#allocation3], 0
    %s13 = scalar_lea.sflag [#allocation3], 1
    %14 = vsyncpa %s13, 0
    loop: start=0, step=1, limit=4
    $region2: #{tpu_custom_call.1} parent=1 // loop_pre_header
      _
    $region3: #{tpu_custom_call.1} parent=1 // loop_header
      %s16 = sphi 0, %s20
      %p17 = scmp.ge.s32.totalorder %s16, 4
      %s26 = sphi 0, %s28
      %s29 = sphi 0, %s26
      %s30 = sphi 0, %s29
      %s46 = sphi 0, %s30
      %s50 = sphi 0, %s50
      %s52 = sphi 0, %s50
      %s53 = sphi 0, %s52
      %s67 = sphi 0, %s53
      %s71 = sphi 0, %s71
      %s73 = sphi 0, %s71
      %s74 = sphi 0, %s73
      %s88 = sphi 0, %s74
      %s92 = sphi 0, %s92
      %s94 = sphi 0, %s92
      %s95 = sphi 0, %s94
      %s109 = sphi 0, %s95
      %s113 = sphi 0, %s113
      %s115 = sphi 0, %s113
      %s116 = sphi 0, %s115
      %s130 = sphi 0, %s116
      %s134 = sphi 0, %s134
      %s136 = sphi 0, %s134
      %s137 = sphi 0, %s136
      %s151 = sphi 0, %s137
      %s155 = sphi 0, %s155
      %s157 = sphi 0, %s155
      %s158 = sphi 0, %s157
      %s172 = sphi 0, %s158
      %s178 = sphi 0, %s180
      %s181 = sphi 0, %s178
      %s182 = sphi 0, %s181
      %s198 = sphi 0, %s182
    $region4: #{tpu_custom_call.1} parent=1 // loop_header_branch
      %19 = sbr.rel (%p17) target = $region8
    $region5: #{tpu_custom_call.1} parent=1 // loop_body
      %s21 = ssub.s32 %s16, 1
      %s22 = ssub.s32 %s16, 2
      %s23 = sadd.s32 %s16, 1
      %s24 = ssub.s32 %s16, %s23
      %p25 = scmp.eq.s32.totalorder %s24, 0
      %s27 = sadd.s32 %s26, 1
      %s28 = scalar_select %p25, %s26, %s27
      %p31 = pneg %p25
      %p32 = scmp.eq.s32.totalorder %s16, 1
      %p33 = por %p31, %p32
      %p34 = scmp.ne.s32.totalorder %s26, %s29
      %p35 = scmp.eq.s32.totalorder %s16, 0
      %p36 = por %p34, %p35
      %p37 = scmp.ne.s32.totalorder %s26, %s29
      %p38 = scmp.eq.s32.totalorder %s21, 1
      %p39 = por %p37, %p38
      %p40 = scmp.ne.s32.totalorder %s29, %s30
      %p41 = scmp.eq.s32.totalorder %s21, 0
      %p42 = por %p40, %p41
      %p43 = scmp.ne.s32.totalorder %s29, %s30
      %p44 = scmp.eq.s32.totalorder %s22, 1
      %p45 = por %p43, %p44
      %p47 = scmp.ne.s32.totalorder %s30, %s46
      %p48 = scmp.eq.s32.totalorder %s22, 0
      %p49 = por %p47, %p48
      %s51 = sadd.s32 %s50, 1
      %p54 = scmp.eq.s32.totalorder %s16, 1
      %p55 = scmp.ne.s32.totalorder %s50, %s52
      %p56 = scmp.eq.s32.totalorder %s16, 0
      %p57 = por %p55, %p56
      %p58 = scmp.ne.s32.totalorder %s50, %s52
      %p59 = scmp.eq.s32.totalorder %s21, 1
      %p60 = por %p58, %p59
      %p61 = scmp.ne.s32.totalorder %s52, %s53
      %p62 = scmp.eq.s32.totalorder %s21, 0
      %p63 = por %p61, %p62
      %p64 = scmp.ne.s32.totalorder %s52, %s53
      %p65 = scmp.eq.s32.totalorder %s22, 1
      %p66 = por %p64, %p65
      %p68 = scmp.ne.s32.totalorder %s53, %s67
      %p69 = scmp.eq.s32.totalorder %s22, 0
      %p70 = por %p68, %p69
      %s72 = sadd.s32 %s71, 1
      %p75 = scmp.eq.s32.totalorder %s16, 1
      %p76 = scmp.ne.s32.totalorder %s71, %s73
      %p77 = scmp.eq.s32.totalorder %s16, 0
      %p78 = por %p76, %p77
      %p79 = scmp.ne.s32.totalorder %s71, %s73
      %p80 = scmp.eq.s32.totalorder %s21, 1
      %p81 = por %p79, %p80
      %p82 = scmp.ne.s32.totalorder %s73, %s74
      %p83 = scmp.eq.s32.totalorder %s21, 0
      %p84 = por %p82, %p83
      %p85 = scmp.ne.s32.totalorder %s73, %s74
      %p86 = scmp.eq.s32.totalorder %s22, 1
      %p87 = por %p85, %p86
      %p89 = scmp.ne.s32.totalorder %s74, %s88
      %p90 = scmp.eq.s32.totalorder %s22, 0
      %p91 = por %p89, %p90
      %s93 = sadd.s32 %s92, 1
      %p96 = scmp.eq.s32.totalorder %s16, 1
      %p97 = scmp.ne.s32.totalorder %s92, %s94
      %p98 = scmp.eq.s32.totalorder %s16, 0
      %p99 = por %p97, %p98
      %p100 = scmp.ne.s32.totalorder %s92, %s94
      %p101 = scmp.eq.s32.totalorder %s21, 1
      %p102 = por %p100, %p101
      %p103 = scmp.ne.s32.totalorder %s94, %s95
      %p104 = scmp.eq.s32.totalorder %s21, 0
      %p105 = por %p103, %p104
      %p106 = scmp.ne.s32.totalorder %s94, %s95
      %p107 = scmp.eq.s32.totalorder %s22, 1
      %p108 = por %p106, %p107
      %p110 = scmp.ne.s32.totalorder %s95, %s109
      %p111 = scmp.eq.s32.totalorder %s22, 0
      %p112 = por %p110, %p111
      %s114 = sadd.s32 %s113, 1
      %p117 = scmp.eq.s32.totalorder %s16, 1
      %p118 = scmp.ne.s32.totalorder %s113, %s115
      %p119 = scmp.eq.s32.totalorder %s16, 0
      %p120 = por %p118, %p119
      %p121 = scmp.ne.s32.totalorder %s113, %s115
      %p122 = scmp.eq.s32.totalorder %s21, 1
      %p123 = por %p121, %p122
      %p124 = scmp.ne.s32.totalorder %s115, %s116
      %p125 = scmp.eq.s32.totalorder %s21, 0
      %p126 = por %p124, %p125
      %p127 = scmp.ne.s32.totalorder %s115, %s116
      %p128 = scmp.eq.s32.totalorder %s22, 1
      %p129 = por %p127, %p128
      %p131 = scmp.ne.s32.totalorder %s116, %s130
      %p132 = scmp.eq.s32.totalorder %s22, 0
      %p133 = por %p131, %p132
      %s135 = sadd.s32 %s134, 1
      %p138 = scmp.eq.s32.totalorder %s16, 1
      %p139 = scmp.ne.s32.totalorder %s134, %s136
      %p140 = scmp.eq.s32.totalorder %s16, 0
      %p141 = por %p139, %p140
      %p142 = scmp.ne.s32.totalorder %s134, %s136
      %p143 = scmp.eq.s32.totalorder %s21, 1
      %p144 = por %p142, %p143
      %p145 = scmp.ne.s32.totalorder %s136, %s137
      %p146 = scmp.eq.s32.totalorder %s21, 0
      %p147 = por %p145, %p146
      %p148 = scmp.ne.s32.totalorder %s136, %s137
      %p149 = scmp.eq.s32.totalorder %s22, 1
      %p150 = por %p148, %p149
      %p152 = scmp.ne.s32.totalorder %s137, %s151
      %p153 = scmp.eq.s32.totalorder %s22, 0
      %p154 = por %p152, %p153
      %s156 = sadd.s32 %s155, 1
      %p159 = scmp.eq.s32.totalorder %s16, 1
      %p160 = scmp.ne.s32.totalorder %s155, %s157
      %p161 = scmp.eq.s32.totalorder %s16, 0
      %p162 = por %p160, %p161
      %p163 = scmp.ne.s32.totalorder %s155, %s157
      %p164 = scmp.eq.s32.totalorder %s21, 1
      %p165 = por %p163, %p164
      %p166 = scmp.ne.s32.totalorder %s157, %s158
      %p167 = scmp.eq.s32.totalorder %s21, 0
      %p168 = por %p166, %p167
      %p169 = scmp.ne.s32.totalorder %s157, %s158
      %p170 = scmp.eq.s32.totalorder %s22, 1
      %p171 = por %p169, %p170
      %p173 = scmp.ne.s32.totalorder %s158, %s172
      %p174 = scmp.eq.s32.totalorder %s22, 0
      %p175 = por %p173, %p174
      %s176 = ssub.s32 %s16, %s23
      %p177 = scmp.eq.s32.totalorder %s176, 0
      %s179 = sadd.s32 %s178, 1
      %s180 = scalar_select %p177, %s178, %s179
      %p183 = pneg %p177
      %p184 = scmp.eq.s32.totalorder %s16, 1
      %p185 = por %p183, %p184
      %p186 = scmp.ne.s32.totalorder %s178, %s181
      %p187 = scmp.eq.s32.totalorder %s16, 0
      %p188 = por %p186, %p187
      %p189 = scmp.ne.s32.totalorder %s178, %s181
      %p190 = scmp.eq.s32.totalorder %s21, 1
      %p191 = por %p189, %p190
      %p192 = scmp.ne.s32.totalorder %s181, %s182
      %p193 = scmp.eq.s32.totalorder %s21, 0
      %p194 = por %p192, %p193
      %p195 = scmp.ne.s32.totalorder %s181, %s182
      %p196 = scmp.eq.s32.totalorder %s22, 1
      %p197 = por %p195, %p196
      %p199 = scmp.ne.s32.totalorder %s182, %s198
      %p200 = scmp.eq.s32.totalorder %s22, 0
      %p201 = por %p199, %p200
      %p202 = scmp.le.s32.totalorder 1, %s16
      %p203 = scmp.lt.s32.totalorder %s16, 3
      %p204 = pnand %p202, %p203
      %p205 = pneg %p204
      // Predicated region
      $region9: #{tpu_custom_call.1} parent=5 // pred_check
        _
      $region10: #{tpu_custom_call.1} parent=5 // pred_check_branch
        %207 = sbr.rel (%p204) target = $region12
      $region11: #{tpu_custom_call.1} parent=5 // pred_region
        %s208 = ssub.s32 %s16, 1
        // Predicated region
        $region13: #{tpu_custom_call.1} parent=11 // pred_check
          %p209 = pneg %p63
        $region14: #{tpu_custom_call.1} parent=11 // pred_check_branch
          %211 = sbr.rel (%p209) target = $region16
        $region15: #{tpu_custom_call.1} parent=11 // pred_region
          _
        $region16: #{tpu_custom_call.1} parent=11 // pred_fallthru
          _
        // Predicated region
        $region17: #{tpu_custom_call.1} parent=11 // pred_check
          %p212 = pneg %p84
        $region18: #{tpu_custom_call.1} parent=11 // pred_check_branch
          %214 = sbr.rel (%p212) target = $region20
        $region19: #{tpu_custom_call.1} parent=11 // pred_region
          _
        $region20: #{tpu_custom_call.1} parent=11 // pred_fallthru
          _
        // Predicated region
        $region21: #{tpu_custom_call.1} parent=11 // pred_check
          %p215 = pneg %p105
        $region22: #{tpu_custom_call.1} parent=11 // pred_check_branch
          %217 = sbr.rel (%p215) target = $region24
        $region23: #{tpu_custom_call.1} parent=11 // pred_region
          _
        $region24: #{tpu_custom_call.1} parent=11 // pred_fallthru
          _
        // Predicated region
        $region25: #{tpu_custom_call.1} parent=11 // pred_check
          %p218 = pneg %p126
        $region26: #{tpu_custom_call.1} parent=11 // pred_check_branch
          %220 = sbr.rel (%p218) target = $region28
        $region27: #{tpu_custom_call.1} parent=11 // pred_region
          _
        $region28: #{tpu_custom_call.1} parent=11 // pred_fallthru
          _
        // Predicated region
        $region29: #{tpu_custom_call.1} parent=11 // pred_check
          %p221 = pneg %p147
        $region30: #{tpu_custom_call.1} parent=11 // pred_check_branch
          %223 = sbr.rel (%p221) target = $region32
        $region31: #{tpu_custom_call.1} parent=11 // pred_region
          _
        $region32: #{tpu_custom_call.1} parent=11 // pred_fallthru
          _
        // Predicated region
        $region33: #{tpu_custom_call.1} parent=11 // pred_check
          %p224 = pneg %p168
        $region34: #{tpu_custom_call.1} parent=11 // pred_check_branch
          %226 = sbr.rel (%p224) target = $region36
        $region35: #{tpu_custom_call.1} parent=11 // pred_region
          _
        $region36: #{tpu_custom_call.1} parent=11 // pred_fallthru
          _
      $region12: #{tpu_custom_call.1} parent=5 // pred_fallthru
        _
      %p227 = scmp.lt.s32.totalorder %s16, 2
      // Predicated region
      $region37: #{tpu_custom_call.1} parent=5 // pred_check
        %p228 = pneg %p227
      $region38: #{tpu_custom_call.1} parent=5 // pred_check_branch
        %230 = sbr.rel (%p228) target = $region40
      $region39: #{tpu_custom_call.1} parent=5 // pred_region
        // Predicated region
        $region41: #{tpu_custom_call.1} parent=39 // pred_check
          %p231 = pneg %p36
        $region42: #{tpu_custom_call.1} parent=39 // pred_check_branch
          %233 = sbr.rel (%p231) target = $region44
        $region43: #{tpu_custom_call.1} parent=39 // pred_region
          %p234 = scmp.lt.s32.totalorder %s16, 1
          %s235 = scalar_select %p234, %s16, 1
          %s236 = smul.addr %s235, 4
          %s237 = scalar_lea.vmem %s0, %s236
        $region44: #{tpu_custom_call.1} parent=39 // pred_fallthru
          _
      $region40: #{tpu_custom_call.1} parent=5 // pred_fallthru
        _
      %p238 = scmp.le.s32.totalorder 1, %s16
      %p239 = scmp.lt.s32.totalorder %s16, 3
      %p240 = pnand %p238, %p239
      %p241 = pneg %p240
      // Predicated region
      $region45: #{tpu_custom_call.1} parent=5 // pred_check
        _
      $region46: #{tpu_custom_call.1} parent=5 // pred_check_branch
        %243 = sbr.rel (%p240) target = $region48
      $region47: #{tpu_custom_call.1} parent=5 // pred_region
        %s244 = ssub.s32 %s16, 1
        %p245 = scmp.lt.s32.totalorder %s21, 1
        %s246 = scalar_select %p245, %s21, 1
        %s247 = smul.addr %s246, 4
        %s248 = scalar_lea.vmem %s0, %s247
        %p249 = pneg %p42
        %p250 = pneg %p39
        %p251 = pneg %p63
        %p252 = pneg %p60
        %p253 = pneg %p84
        %p254 = pneg %p81
        %p255 = pneg %p105
        %p256 = pneg %p102
        %p257 = pneg %p126
        %p258 = pneg %p123
        %p259 = pneg %p147
        %p260 = pneg %p144
        %p261 = pneg %p168
        %p262 = pneg %p165
        %p263 = pneg %p194
        %p264 = pneg %p191
        %s265 = sand.u32 %s181, 1
        %s266 = scalar_lea.sflag [#allocation3], %s265
        %s267 = sand.u32 %s181, 1
        %s268 = smul.addr %s267, 4
        %s269 = scalar_lea.vmem [#allocation2], %s268
        %p270 = scmp.lt.s32.totalorder %s21, 1
        %s271 = scalar_select %p270, %s21, 1
        %s272 = smul.addr %s271, 4
        %s273 = scalar_lea.vmem %s0, %s272
        %v275 = vlaneseq
        %v276 = vand.u32 %v275, 127
        %vm277 = vcmp.ne.s32.totalorder %v276, 0
        %vm278 = vcmp.ne.s32.totalorder %v276, 15
        %v279 = vld [vmem:[%s273] sm:$0xf]
        %281 = vrot.lane.b32.xlu0 %v279, 113
        %v282 = vpop.permute.xlu0 %281
        %284 = vrot.lane.b32.xlu0 %v279, 1
        %v285 = vpop.permute.xlu0 %284
        %vm287 = vcmask 7168
        %v288 = vsel %vm287, %v282, %v285
        %v289 = vsel %vm277, 1, 0
        %vm290 = vcmp.eq.s32.totalorder %v289, 1
        %v291 = vsel %vm290, %v288, 0.0
        %292 = vrot.lane.b32.xlu0 %v279, 127
        %v293 = vpop.permute.xlu0 %292
        %295 = vrot.lane.b32.xlu0 %v279, 15
        %v296 = vpop.permute.xlu0 %295
        %vm298 = vcmask 121856
        %v299 = vsel %vm298, %v293, %v296
        %v300 = vsel %vm278, 1, 0
        %vm301 = vcmp.eq.s32.totalorder %v300, 1
        %v302 = vsel %vm301, %v299, 0.0
        %v303 = vrot.slane %v279, 4
        %vm305 = vcmask 1043456
        %v306 = vsel %vm305, %v291, %v303
        %v307 = vpack.c.bf16 %v302, %v306
        %v308 = vld [vmem:[%s1] sm:$0xf]
        %v309 = vld [vmem:[%s2] sm:$0xff]
        %311 = vset.pattern.permute.xlu0 0
        %312 = vperm.xlu0 %311, %v309
        %v313 = vpop.permute.xlu0 %312
        %vm315 = vcmask 97280
        %v317 = vsel %vm315, %v308, 0
        %vm319 = vcmask 1045504
        %v321 = vsel %vm319, %v307, 0
        %323 = vmatprep.subr.bf16.mxu0 0
        %324 = vmatpush1.bf16.msra.mxu0 %v321
        %325 = vmatprep.subr.bf16.mxu0 0
        %326 = vmatpush1.bf16.msra.mxu0 0
        %327 = vmatprep.subr.bf16.mxu0 0
        %328 = vmatpush1.bf16.msra.mxu0 0
        %329 = vmatprep.subr.bf16.mxu0 0
        %330 = vmatpush1.bf16.msra.mxu0 0
        %331 = vmatprep.subr.bf16.mxu0 0
        %332 = vmatpush1.bf16.msra.mxu0 0
        %333 = vmatprep.subr.bf16.mxu0 0
        %334 = vmatpush1.bf16.msra.mxu0 0
        %335 = vmatprep.subr.bf16.mxu0 0
        %336 = vmatpush1.bf16.msra.mxu0 0
        %337 = vmatprep.subr.bf16.mxu0 0
        %338 = vmatpush1.bf16.msra.mxu0 0
        %339 = vmatprep.subr.bf16.mxu0 0
        %340 = vmatpush1.bf16.msra.mxu0 0
        %341 = vmatprep.subr.bf16.mxu0 0
        %342 = vmatpush1.bf16.msra.mxu0 0
        %343 = vmatprep.subr.bf16.mxu0 0
        %344 = vmatpush1.bf16.msra.mxu0 0
        %345 = vmatprep.subr.bf16.mxu0 0
        %346 = vmatpush1.bf16.msra.mxu0 0
        %347 = vmatprep.subr.bf16.mxu0 0
        %348 = vmatpush1.bf16.msra.mxu0 0
        %349 = vmatprep.subr.bf16.mxu0 0
        %350 = vmatpush1.bf16.msra.mxu0 0
        %351 = vmatprep.subr.bf16.mxu0 0
        %352 = vmatpush1.bf16.msra.mxu0 0
        %353 = vmatprep.subr.bf16.mxu0 0
        %354 = vmatpush1.bf16.msra.mxu0 0
        %355 = vmatprep.mubr.bf16.mxu0 0
        %356 = vmatmul.mubr.bf16.gmra.mrb[0].mxu0 %v317
        %v357 = vpop.f32.mrb[0].mxu0
        %v358 = vadd.f32 %v313, %v357
        %v359 = vpop.f32.mrb[0].mxu0
        %v360 = vpop.f32.mrb[0].mxu0
        %v361 = vpop.f32.mrb[0].mxu0
        %362 = vdwg.mxu0
        %v363 = vmax.f32 %v358, 0.0
        %365 = vrot.lane.b32.xlu0 %v363, 113
        %v366 = vpop.permute.xlu0 %365
        %368 = vrot.lane.b32.xlu0 %v363, 1
        %v369 = vpop.permute.xlu0 %368
        %v371 = vsel %vm287, %v366, %v369
        %v372 = vsel %vm290, %v371, 0.0
        %373 = vrot.lane.b32.xlu0 %v363, 127
        %v374 = vpop.permute.xlu0 %373
        %376 = vrot.lane.b32.xlu0 %v363, 15
        %v377 = vpop.permute.xlu0 %376
        %v379 = vsel %vm298, %v374, %v377
        %v380 = vsel %vm301, %v379, 0.0
        %v381 = vpack.c.bf16 %v363, %v372
        %v382 = vpack.c.bf16 %v380, %v380
        %v383 = vld [vmem:[%s3] sm:$0xf]
        %v384 = vld [vmem:[%s4] sm:$0xff]
        %386 = vset.pattern.permute.xlu0 0
        %387 = vperm.xlu0 %386, %v384
        %v388 = vpop.permute.xlu0 %387
        %vm390 = vcmask 195584
        %v392 = vsel %vm390, %v383, 0
        %v395 = vsel %vm305, %v382, 0
        %397 = vmatprep.subr.bf16.mxu0 0
        %398 = vmatpush1.bf16.msra.mxu0 %v381
        %399 = vmatprep.subr.bf16.mxu0 0
        %400 = vmatpush1.bf16.msra.mxu0 %v395
        %401 = vmatprep.subr.bf16.mxu0 0
        %402 = vmatpush1.bf16.msra.mxu0 0
        %403 = vmatprep.subr.bf16.mxu0 0
        %404 = vmatpush1.bf16.msra.mxu0 0
        %405 = vmatprep.subr.bf16.mxu0 0
        %406 = vmatpush1.bf16.msra.mxu0 0
        %407 = vmatprep.subr.bf16.mxu0 0
        %408 = vmatpush1.bf16.msra.mxu0 0
        %409 = vmatprep.subr.bf16.mxu0 0
        %410 = vmatpush1.bf16.msra.mxu0 0
        %411 = vmatprep.subr.bf16.mxu0 0
        %412 = vmatpush1.bf16.msra.mxu0 0
        %413 = vmatprep.subr.bf16.mxu0 0
        %414 = vmatpush1.bf16.msra.mxu0 0
        %415 = vmatprep.subr.bf16.mxu0 0
        %416 = vmatpush1.bf16.msra.mxu0 0
        %417 = vmatprep.subr.bf16.mxu0 0
        %418 = vmatpush1.bf16.msra.mxu0 0
        %419 = vmatprep.subr.bf16.mxu0 0
        %420 = vmatpush1.bf16.msra.mxu0 0
        %421 = vmatprep.subr.bf16.mxu0 0
        %422 = vmatpush1.bf16.msra.mxu0 0
        %423 = vmatprep.subr.bf16.mxu0 0
        %424 = vmatpush1.bf16.msra.mxu0 0
        %425 = vmatprep.subr.bf16.mxu0 0
        %426 = vmatpush1.bf16.msra.mxu0 0
        %427 = vmatprep.subr.bf16.mxu0 0
        %428 = vmatpush1.bf16.msra.mxu0 0
        %429 = vmatprep.mubr.bf16.mxu0 0
        %430 = vmatmul.mubr.bf16.gmra.mrb[0].mxu0 %v392
        %v431 = vpop.f32.mrb[0].mxu0
        %v432 = vadd.f32 %v388, %v431
        %v433 = vpop.f32.mrb[0].mxu0
        %v434 = vpop.f32.mrb[0].mxu0
        %v435 = vpop.f32.mrb[0].mxu0
        %436 = vdwg.mxu0
        %v437 = vmax.f32 %v432, 0.0
        %v438 = vpack.c.bf16 %v437, %v437
        %v439 = vld [vmem:[%s5] sm:$0x3]
        %v440 = vld [vmem:[%s6] sm:$0xf]
        %442 = vset.pattern.permute.xlu0 0
        %443 = vperm.xlu0 %442, %v440
        %v444 = vpop.permute.xlu0 %443
        %vm446 = vcmask 64512
        %v448 = vsel %vm446, %v439, 0
        %v451 = vsel %vm305, %v438, 0
        %453 = vmatprep.subr.bf16.mxu0 0
        %454 = vmatpush1.bf16.msra.mxu0 %v451
        %455 = vmatprep.subr.bf16.mxu0 0
        %456 = vmatpush1.bf16.msra.mxu0 0
        %457 = vmatprep.subr.bf16.mxu0 0
        %458 = vmatpush1.bf16.msra.mxu0 0
        %459 = vmatprep.subr.bf16.mxu0 0
        %460 = vmatpush1.bf16.msra.mxu0 0
        %461 = vmatprep.subr.bf16.mxu0 0
        %462 = vmatpush1.bf16.msra.mxu0 0
        %463 = vmatprep.subr.bf16.mxu0 0
        %464 = vmatpush1.bf16.msra.mxu0 0
        %465 = vmatprep.subr.bf16.mxu0 0
        %466 = vmatpush1.bf16.msra.mxu0 0
        %467 = vmatprep.subr.bf16.mxu0 0
        %468 = vmatpush1.bf16.msra.mxu0 0
        %469 = vmatprep.subr.bf16.mxu0 0
        %470 = vmatpush1.bf16.msra.mxu0 0
        %471 = vmatprep.subr.bf16.mxu0 0
        %472 = vmatpush1.bf16.msra.mxu0 0
        %473 = vmatprep.subr.bf16.mxu0 0
        %474 = vmatpush1.bf16.msra.mxu0 0
        %475 = vmatprep.subr.bf16.mxu0 0
        %476 = vmatpush1.bf16.msra.mxu0 0
        %477 = vmatprep.subr.bf16.mxu0 0
        %478 = vmatpush1.bf16.msra.mxu0 0
        %479 = vmatprep.subr.bf16.mxu0 0
        %480 = vmatpush1.bf16.msra.mxu0 0
        %481 = vmatprep.subr.bf16.mxu0 0
        %482 = vmatpush1.bf16.msra.mxu0 0
        %483 = vmatprep.subr.bf16.mxu0 0
        %484 = vmatpush1.bf16.msra.mxu0 0
        %485 = vmatprep.mubr.bf16.mxu0 0
        %486 = vmatmul.mubr.bf16.gmra.mrb[0].mxu0 %v448
        %v487 = vpop.f32.mrb[0].mxu0
        %v488 = vadd.f32 %v444, %v487
        %v489 = vpop.f32.mrb[0].mxu0
        %v490 = vpop.f32.mrb[0].mxu0
        %v491 = vpop.f32.mrb[0].mxu0
        %492 = vdwg.mxu0
        %494 = vrot.lane.b32.xlu0 %v488, 1
        %v495 = vpop.permute.xlu0 %494
        %497 = vrot.lane.b32.xlu0 %v440, 17
        %v498 = vpop.permute.xlu0 %497
        %v500 = vsel %vm287, %v440, %v495
        %vm501 = vcmask 138240
        %v502 = vsel %vm501, %v500, %v498
        %vm503 = vcmask 142336
        %504 = vst.msk [vmem:[%s269] sm:$0xf] %vm503, %v502
        %s505 = sand.u32 %s181, 1
        %s506 = scalar_lea.sflag [#allocation3], %s505
        %s507 = sand.u32 %s181, 1
        %s508 = smul.addr %s507, 4
        %s509 = scalar_lea.vmem [#allocation2], %s508
        // Predicated region
        $region49: #{tpu_custom_call.1} parent=47 // pred_check
          %p510 = pneg %p191
        $region50: #{tpu_custom_call.1} parent=47 // pred_check_branch
          %512 = sbr.rel (%p510) target = $region52
        $region51: #{tpu_custom_call.1} parent=47 // pred_region
          %s514 = ssub.s32 64, 64
          %515 = vsyncadd %s506, %s514
          %s516 = smul.addr %s21, 64
          %s517 = scalar_lea.hbm %s7, %s516
          %s519 = sshll.u32 %s509, 4
          %s520 = int_to_ptr.vmem [resolvable:$true] %s519
          %522 = dma.vmem_to_hbm [thread:$0]  %s520, 64, %s517, %s506
        $region52: #{tpu_custom_call.1} parent=47 // pred_fallthru
          _
      $region48: #{tpu_custom_call.1} parent=5 // pred_fallthru
        _
      %p523 = scmp.le.s32.totalorder 2, %s16
      // Predicated region
      $region53: #{tpu_custom_call.1} parent=5 // pred_check
        %p524 = pneg %p523
      $region54: #{tpu_custom_call.1} parent=5 // pred_check_branch
        %526 = sbr.rel (%p524) target = $region56
      $region55: #{tpu_custom_call.1} parent=5 // pred_region
        %s527 = ssub.s32 %s16, 2
        // Predicated region
        $region57: #{tpu_custom_call.1} parent=55 // pred_check
          %p528 = pneg %p197
        $region58: #{tpu_custom_call.1} parent=55 // pred_check_branch
          %530 = sbr.rel (%p528) target = $region60
        $region59: #{tpu_custom_call.1} parent=55 // pred_region
          %s531 = sand.u32 %s182, 1
          %s532 = scalar_lea.sflag [#allocation3], %s531
          %s533 = sand.u32 %s182, 1
          %s534 = smul.addr %s533, 4
          %s535 = scalar_lea.vmem [#allocation2], %s534
          %536 = dma.done %s532, 64
        $region60: #{tpu_custom_call.1} parent=55 // pred_fallthru
          _
      $region56: #{tpu_custom_call.1} parent=5 // pred_fallthru
        _
    $region6: #{tpu_custom_call.1} parent=1 // loop_footer
      %s20 = sadd.s32 1, %s16
    $region7: #{tpu_custom_call.1} parent=1 // loop_footer_branch
      %15 = sbr.rel target = $region3
    $region8: #{tpu_custom_call.1} parent=1 // loop_exit
      _
    %537 = vsyncpa [#allocation3], 1
    %s538 = scalar_lea.sflag [#allocation3], 1
    %539 = vsyncpa %s538, 1

</llo_original>
